<compile_context>
chip_gen: v6e
topology: v6e:2x2x1
jax: 0.10.0
libtpu: 0.0.40
codegen_flags: <defaults>
</compile_context>

<pallas_src>
import jax
import jax.numpy as jnp
from jax.experimental import pallas as pl
from jax.experimental.pallas import tpu as pltpu

_VMEM_LIMIT = 32 * 1024 * 1024          # <= physical VMEM on v5e/v6e/v7x
_TARGET_BLOCK_BYTES = 2 * 1024 * 1024   # ~2 MiB per stream per block (roofline knee)
_LANES = 1024                           # lane-dense last dim for the flattened view
_MAX_LANE_TILE = 2048                   # lane tile cap for the (rows, pixels) modulus view


def _round_up(x, m):
    return ((x + m - 1) // m) * m


def _row_tile_max(lanes):
    """Rows per block so one (rows, lanes) f32 block is ~_TARGET_BLOCK_BYTES."""
    return max(8, (_TARGET_BLOCK_BYTES // (lanes * 4)) // 8 * 8)


def _even_tile(size, max_tile, align):
    """Pick a tile <= ~max_tile that splits `size` into equal-sized blocks with minimal
    padding.  Returns (tile, padded_size).  If the whole dim fits in one block the block
    equals the full dim (exempt from the (8,128) divisibility rule) and no padding is
    added; otherwise the tile is `align`-aligned and >= size/ceil(size/max_tile), i.e.
    blocks are never shrunk below the roofline-knee target by over-splitting."""
    if size <= max_tile:
        return size, size
    nblocks = pl.cdiv(size, max_tile)
    tile = _round_up(pl.cdiv(size, nblocks), align)
    return tile, _round_up(size, tile)


# ----------------------------------------------------------------------------
# Kernels (planar re/im streams)
# ----------------------------------------------------------------------------
def _relu2_kernel(xr_ref, xi_ref, yr_ref, yi_ref):
    # cartesian: activation applied independently to real / imag parts
    yr_ref[...] = jnp.maximum(xr_ref[...], 0.0)
    yi_ref[...] = jnp.maximum(xi_ref[...], 0.0)


def _modulus_kernel(xr_ref, xi_ref, b_ref, yr_ref, yi_ref):
    # xr/xi: (tr, tl) f32 planar real / imag parts
    # b    : (tr, 1) per-(n,c) bias (fast path) or (tr, tl) spatially varying bias
    xr = xr_ref[...]
    xi = xi_ref[...]
    mag2 = xr * xr + xi * xi
    nz = mag2 > 0.0
    inv = jax.lax.rsqrt(jnp.where(nz, mag2, 1.0))      # single EUP op, exact for mag2 > 0
    zabs = mag2 * inv                                   # == sqrt(mag2)
    act = jnp.maximum(zabs + b_ref[...], 0.0)           # ReLU(|z| + bias)
    scale = act * inv                                   # act / |z| (finite everywhere)
    # z == 0: torch angle(0) == 0 -> output (act, 0); xi == 0 already gives imag part 0.
    yr_ref[...] = jnp.where(nz, scale * xr, act)
    yi_ref[...] = scale * xi


# ----------------------------------------------------------------------------
# Forward wrappers (jitted; conversions are flagged for input fusion)
# ----------------------------------------------------------------------------
@jax.jit
def _cartesian_forward(z):
    shape = z.shape
    xr = jnp.real(z).astype(jnp.float32).reshape(-1)
    xi = jnp.imag(z).astype(jnp.float32).reshape(-1)
    total = xr.shape[0]

    lanes = _LANES if total >= _LANES else total
    rows = pl.cdiv(total, lanes)
    tr, rows_p = _even_tile(rows, _row_tile_max(lanes), 8)
    padded_total = rows_p * lanes
    if padded_total != total:
        xr = jnp.pad(xr, (0, padded_total - total))
        xi = jnp.pad(xi, (0, padded_total - total))
    xr2 = xr.reshape(rows_p, lanes)
    xi2 = xi.reshape(rows_p, lanes)

    spec = pl.BlockSpec((tr, lanes), lambda i: (i, 0))
    yr2, yi2 = pl.pallas_call(
        _relu2_kernel,
        out_shape=(jax.ShapeDtypeStruct((rows_p, lanes), jnp.float32),
                   jax.ShapeDtypeStruct((rows_p, lanes), jnp.float32)),
        grid=(rows_p // tr,),
        in_specs=[spec, spec],
        out_specs=[spec, spec],
        compiler_params=pltpu.CompilerParams(
            dimension_semantics=("parallel",),
            vmem_limit_bytes=_VMEM_LIMIT,
            allow_input_fusion=[True, True],
        ),
    )(xr2, xi2)

    yr = yr2.reshape(-1)[:total].reshape(shape)
    yi = yi2.reshape(-1)[:total].reshape(shape)
    return jax.lax.complex(yr, yi)


@jax.jit
def _modulus_forward(z, bias2d):
    N, C, H, W = z.shape
    R, L = N * C, H * W
    xr = jnp.real(z).astype(jnp.float32).reshape(R, L)
    xi = jnp.imag(z).astype(jnp.float32).reshape(R, L)

    tl, Lp = _even_tile(L, _MAX_LANE_TILE, 128)
    tr, Rp = _even_tile(R, _row_tile_max(tl), 8)

    needs_pad = (Rp, Lp) != (R, L)
    if needs_pad:
        pad = ((0, Rp - R), (0, Lp - L))
        xr = jnp.pad(xr, pad)
        xi = jnp.pad(xi, pad)

    data_spec = pl.BlockSpec((tr, tl), lambda i, j: (i, j))
    if bias2d.shape[1] == 1:                          # per-(n, c) scalar bias (common case)
        b = jnp.pad(bias2d, ((0, Rp - R), (0, 0))) if Rp != R else bias2d
        b_spec = pl.BlockSpec((tr, 1), lambda i, j: (i, 0))   # constant over j -> no re-DMA
    else:                                             # spatially varying bias
        b = jnp.pad(bias2d, ((0, Rp - R), (0, Lp - L))) if needs_pad else bias2d
        b_spec = data_spec

    yr, yi = pl.pallas_call(
        _modulus_kernel,
        out_shape=(jax.ShapeDtypeStruct((Rp, Lp), jnp.float32),
                   jax.ShapeDtypeStruct((Rp, Lp), jnp.float32)),
        grid=(Rp // tr, Lp // tl),
        in_specs=[data_spec, data_spec, b_spec],
        out_specs=[data_spec, data_spec],
        compiler_params=pltpu.CompilerParams(
            dimension_semantics=("parallel", "parallel"),
            vmem_limit_bytes=_VMEM_LIMIT,
            allow_input_fusion=[True, True, True],
        ),
    )(xr, xi, b)

    yr = yr[:R, :L].reshape(N, C, H, W)
    yi = yi[:R, :L].reshape(N, C, H, W)
    return jax.lax.complex(yr, yi)


# ----------------------------------------------------------------------------
# Module
# ----------------------------------------------------------------------------
class ComplexActivationPallas:
    """JAX/Pallas port of modulus ComplexActivation (activation = ReLU)."""

    def __init__(self, mode="cartesian", bias_shape=None, bias_init=None):
        self.mode = mode
        if mode == "modulus":
            shape = tuple(bias_shape) if bias_shape is not None else (1,)
            if bias_init is None:
                self.bias = jnp.zeros(shape, jnp.float32)       # matches torch.zeros init
            else:
                self.bias = jnp.asarray(bias_init, jnp.float32).reshape(shape)
        else:
            self.bias = jnp.zeros((1,), jnp.float32)            # registered buffer (unused)

    def _bias2d(self, N, C, H, W):
        b = self.bias
        shape4 = (1,) * max(0, 4 - b.ndim) + tuple(b.shape)
        b4 = b.reshape(shape4)
        if shape4[-1] == 1 and shape4[-2] == 1:
            # bias constant over H, W -> one scalar per (n, c) row
            return jnp.broadcast_to(b4, (N, C, 1, 1)).reshape(N * C, 1).astype(jnp.float32)
        # spatially varying bias: planar layout, rows = (n, c), lanes = pixels
        bf = jnp.broadcast_to(b4, (N, C, H, W)).astype(jnp.float32)
        return bf.reshape(N * C, H * W)

    def __call__(self, z):
        if self.mode == "cartesian":
            return _cartesian_forward(z)
        if self.mode == "modulus":
            N, C, H, W = z.shape
            return _modulus_forward(z, self._bias2d(N, C, H, W))
        return z  # identity


# ----------------------------------------------------------------------------
# Pure-JAX reference (correctness sanity check)
# ----------------------------------------------------------------------------
def _reference(z, mode, bias=None):
    if mode == "cartesian":
        return (jnp.maximum(jnp.real(z), 0.0) + 1j * jnp.maximum(jnp.imag(z), 0.0)).astype(jnp.complex64)
    if mode == "modulus":
        b = 0.0 if bias is None else bias
        zabs = jnp.sqrt(jnp.square(jnp.real(z)) + jnp.square(jnp.imag(z)))
        act = jnp.maximum(zabs + b, 0.0)
        ang = jnp.arctan2(jnp.imag(z), jnp.real(z))
        return (act * jnp.exp(1j * ang)).astype(jnp.complex64)
    return z


if __name__ == "__main__":
    key = jax.random.PRNGKey(0)
    k_re, k_im, k_b, k_re2, k_im2 = jax.random.split(key, 5)

    def make_z(k1, k2, shape):
        return (jax.random.normal(k1, shape, jnp.float32)
                + 1j * jax.random.normal(k2, shape, jnp.float32)).astype(jnp.complex64)

    N, C, H, W = 2, 4, 16, 16
    z = make_z(k_re, k_im, (N, C, H, W))
    z_odd = make_z(k_re2, k_im2, (1, 3, 10, 10))        # exercises the padding paths

    bias_ch = 0.1 * jax.random.normal(k_b, (1, C, 1, 1), jnp.float32)
    bias_sp = 0.1 * jax.random.normal(k_b, (1, 1, H, W), jnp.float32)
    bias_odd = 0.05 * jnp.arange(3, dtype=jnp.float32).reshape(1, 3, 1, 1)

    cases = [
        ("cartesian", ComplexActivationPallas(mode="cartesian"), z, None),
        ("cartesian_odd", ComplexActivationPallas(mode="cartesian"), z_odd, None),
        ("modulus_scalar", ComplexActivationPallas(mode="modulus"), z, jnp.zeros((1,), jnp.float32)),
        ("modulus_channel",
         ComplexActivationPallas(mode="modulus", bias_shape=(1, C, 1, 1), bias_init=bias_ch), z, bias_ch),
        ("modulus_spatial",
         ComplexActivationPallas(mode="modulus", bias_shape=(1, 1, H, W), bias_init=bias_sp), z, bias_sp),
        ("modulus_odd",
         ComplexActivationPallas(mode="modulus", bias_shape=(1, 3, 1, 1), bias_init=bias_odd), z_odd, bias_odd),
        ("identity", ComplexActivationPallas(mode="identity"), z, None),
    ]

    ok = True
    for name, mod, zin, bias in cases:
        out = jax.block_until_ready(mod(zin))
        mode = mod.mode if mod.mode in ("cartesian", "modulus") else "identity"
        ref = _reference(zin, mode, bias)
        if not jnp.allclose(out, ref, atol=1e-4, rtol=1e-4):
            ok = False
            print(f"MISMATCH in case {name}: max abs err = {jnp.max(jnp.abs(out - ref))}")

    if ok:
        print("KERNEL_OK")
</pallas_src>

<mosaic_0001>
module attributes {stable_mosaic.version = 11 : i64} {
  func.func @_relu2_kernel(%arg0: i32, %arg1: memref<2x1024xf32, #tpu.memory_space<vmem>>, %arg2: memref<2x1024xf32, #tpu.memory_space<vmem>>, %arg3: memref<2x1024xf32, #tpu.memory_space<vmem>>, %arg4: memref<2x1024xf32, #tpu.memory_space<vmem>>) attributes {dimension_semantics = [#tpu.dimension_semantics<parallel>], iteration_bounds = array<i64: 1>, scalar_prefetch = 0 : i64, scratch_operands = 0 : i64, tpu.core_type = #tpu.core_type<tc>, window_params = [{transform_indices = @transform_0, window_bounds = array<i64: 2, 1024>}, {transform_indices = @transform_1, window_bounds = array<i64: 2, 1024>}, {transform_indices = @transform_2, window_bounds = array<i64: 2, 1024>}, {transform_indices = @transform_3, window_bounds = array<i64: 2, 1024>}]} {
    %c0 = arith.constant 0 : index
    %c0_0 = arith.constant 0 : index
    %0 = vector.load %arg1[%c0, %c0_0] : memref<2x1024xf32, #tpu.memory_space<vmem>>, vector<2x1024xf32>
    %cst = arith.constant 0.000000e+00 : f32
    %1 = vector.broadcast %cst : f32 to vector<2x1024xf32>
    %2 = arith.maximumf %0, %1 : vector<2x1024xf32>
    %c0_1 = arith.constant 0 : index
    %c0_2 = arith.constant 0 : index
    %3 = vector.load %arg3[%c0_1, %c0_2] : memref<2x1024xf32, #tpu.memory_space<vmem>>, vector<2x1024xf32>
    tpu.vector_store %arg3[%c0_1, %c0_2], %2 {strides = array<i32>} : memref<2x1024xf32, #tpu.memory_space<vmem>>, vector<2x1024xf32>,
    %c0_3 = arith.constant 0 : index
    %c0_4 = arith.constant 0 : index
    %4 = vector.load %arg2[%c0_3, %c0_4] : memref<2x1024xf32, #tpu.memory_space<vmem>>, vector<2x1024xf32>
    %cst_5 = arith.constant 0.000000e+00 : f32
    %5 = vector.broadcast %cst_5 : f32 to vector<2x1024xf32>
    %6 = arith.maximumf %4, %5 : vector<2x1024xf32>
    %c0_6 = arith.constant 0 : index
    %c0_7 = arith.constant 0 : index
    %7 = vector.load %arg4[%c0_6, %c0_7] : memref<2x1024xf32, #tpu.memory_space<vmem>>, vector<2x1024xf32>
    tpu.vector_store %arg4[%c0_6, %c0_7], %6 {strides = array<i32>} : memref<2x1024xf32, #tpu.memory_space<vmem>>, vector<2x1024xf32>,
    return
  }
  func.func @transform_0(%arg0: i32) -> (i32, i32) {
    %c0_i32 = arith.constant 0 : i32
    %c0_i32_0 = arith.constant 0 : i32
    return %arg0, %c0_i32 : i32, i32
  }
  func.func @transform_1(%arg0: i32) -> (i32, i32) {
    %c0_i32 = arith.constant 0 : i32
    %c0_i32_0 = arith.constant 0 : i32
    return %arg0, %c0_i32 : i32, i32
  }
  func.func @transform_2(%arg0: i32) -> (i32, i32) {
    %c0_i32 = arith.constant 0 : i32
    %c0_i32_0 = arith.constant 0 : i32
    return %arg0, %c0_i32 : i32, i32
  }
  func.func @transform_3(%arg0: i32) -> (i32, i32) {
    %c0_i32 = arith.constant 0 : i32
    %c0_i32_0 = arith.constant 0 : i32
    return %arg0, %c0_i32 : i32, i32
  }
}

</mosaic_0001>

<llo_original>
// kernel: custom-call.1
$region0: #{custom-call.1}
  %s0 = inlined_call_operand.hbm [shape: c64[2,4,16,16], index: 0, kind: input, shape index: {}]
  %s1 = inlined_call_operand.vmem [shape: f32[2,4,16,16], index: 1, kind: output, shape index: {}]
  %s2 = scalar_lea.hbm %s0, 2048
  $region1: #{custom-call.1} parent=0
    #allocation0 [shape = 's32[1]{0}', space=sflag, size = 0x4, scoped, tag = 'scoped memory for custom-call.1']
    %3 = vsyncpa [#allocation0], 0
    %s4 = sshll.u32 %s1, 4
    %s5 = int_to_ptr.vmem [resolvable:$true] %s4
    %7 = dma.hbm_to_vmem [thread:$0]  %s2, 2048, %s5, [#allocation0]
    %8 = dma.done [#allocation0], 2048
    %9 = vsyncpa [#allocation0], 1

// kernel: custom-call
$region0: #{custom-call}
  %s0 = inlined_call_operand.hbm [shape: c64[2,4,16,16], index: 0, kind: input, shape index: {}]
  %s1 = inlined_call_operand.vmem [shape: f32[2,4,16,16], index: 1, kind: output, shape index: {}]
  $region1: #{custom-call} parent=0
    #allocation0 [shape = 's32[1]{0}', space=sflag, size = 0x4, scoped, tag = 'scoped memory for custom-call']
    %2 = vsyncpa [#allocation0], 0
    %s3 = sshll.u32 %s1, 4
    %s4 = int_to_ptr.vmem [resolvable:$true] %s3
    %6 = dma.hbm_to_vmem [thread:$0]  %s0, 2048, %s4, [#allocation0]
    %7 = dma.done [#allocation0], 2048
    %8 = vsyncpa [#allocation0], 1

// kernel: custom-call.2
$region0: #{custom-call.2}
  %s0 = inlined_call_operand.vmem [shape: f32[2,4,16,16], index: 0, kind: input, shape index: {}]
  %s1 = inlined_call_operand.vmem [shape: f32[2,4,16,16], index: 1, kind: input, shape index: {}]
  %s2 = inlined_call_operand.hbm [shape: c64[2,4,16,16], index: 2, kind: output, shape index: {}]
  %s3 = scalar_lea.hbm %s2, 2048
  $region1: #{custom-call.2} parent=0
    #allocation0 [shape = 's32[1]{0}', space=sflag, size = 0x4, scoped, tag = 'scoped memory for custom-call.2']
    %4 = vsyncpa [#allocation0], 0
    %s5 = sshll.u32 %s0, 4
    %s6 = int_to_ptr.vmem [resolvable:$true] %s5
    %8 = dma.vmem_to_hbm [thread:$0]  %s6, 2048, %s2, [#allocation0]
    %9 = dma.done [#allocation0], 2048
    %10 = vsyncpa [#allocation0], 1
  $region2: #{custom-call.2} parent=0
    #allocation1 [shape = 's32[1]{0}', space=sflag, size = 0x4, scoped, tag = 'scoped memory for custom-call.2']
    %11 = vsyncpa [#allocation1], 0
    %s12 = sshll.u32 %s1, 4
    %s13 = int_to_ptr.vmem [resolvable:$true] %s12
    %15 = dma.vmem_to_hbm [thread:$0]  %s13, 2048, %s3, [#allocation1]
    %16 = dma.done [#allocation1], 2048
    %17 = vsyncpa [#allocation1], 1

// kernel: _cartesian_forward.1
$region0: #{_cartesian_forward.1}
  #allocation0 [shape = 'u32[]', space=smem, size = 0x4, offset = 0x4, fixed_abs, tag = 'smem constant byte address 0x4 - core index']
  #allocation1 [shape = 'u32[144,128]{1,0:T(1,128)}', space=vmem, size = 0x12000, scoped, tag = 'internal scratch']
  %s0 = inlined_call_operand.vmem [shape: f32[2,1024], index: 0, kind: input, shape index: {}]
  %s1 = inlined_call_operand.vmem [shape: f32[2,1024], index: 1, kind: input, shape index: {}]
  %s2 = inlined_call_operand.vmem [shape: f32[2,1024], index: 2, kind: output, shape index: {0}]
  %s3 = inlined_call_operand.vmem [shape: f32[2,1024], index: 3, kind: output, shape index: {1}]
  %4 = xla_tuple %s2, %s3
  %s5 = sld [smem:[#allocation0]]
  $region26: #{_cartesian_forward.1} parent=0
    _
  %s7 = ssub.s32 1, %s5
  %s8 = scalar_select 0, %s7, %s5
  // Predicated region
  $region2: #{_cartesian_forward.1} parent=0 // pred_check
    _
  $region3: #{_cartesian_forward.1} parent=0 // pred_check_branch
    %10 = sbr.rel (0) target = $region5
  $region4: #{_cartesian_forward.1} parent=0 // pred_region
    _
  $region5: #{_cartesian_forward.1} parent=0 // pred_fallthru
    _
  // Predicated region
  $region6: #{_cartesian_forward.1} parent=0 // pred_check
    _
  $region7: #{_cartesian_forward.1} parent=0 // pred_check_branch
    %12 = sbr.rel (0) target = $region9
  $region8: #{_cartesian_forward.1} parent=0 // pred_region
    _
  $region9: #{_cartesian_forward.1} parent=0 // pred_fallthru
    _
  %v13 = vld [vmem:[%s0] sm:$0xff]
  %v14 = vld [vmem:[%s0 + $0x8] sm:$0xff]
  %v15 = vmax.f32 %v13, 0.0
  %v16 = vmax.f32 %v14, 0.0
  %17 = vst [vmem:[%s2] sm:$0xff] %v15
  %18 = vst [vmem:[%s2 + $0x8] sm:$0xff] %v16
  %v19 = vld [vmem:[%s1] sm:$0xff]
  %v20 = vld [vmem:[%s1 + $0x8] sm:$0xff]
  %v21 = vmax.f32 %v19, 0.0
  %v22 = vmax.f32 %v20, 0.0
  %23 = vst [vmem:[%s3] sm:$0xff] %v21
  %24 = vst [vmem:[%s3 + $0x8] sm:$0xff] %v22
  // Predicated region
  $region10: #{_cartesian_forward.1} parent=0 // pred_check
    _
  $region11: #{_cartesian_forward.1} parent=0 // pred_check_branch
    %26 = sbr.rel (0) target = $region13
  $region12: #{_cartesian_forward.1} parent=0 // pred_region
    _
  $region13: #{_cartesian_forward.1} parent=0 // pred_fallthru
    _
  // Predicated region
  $region14: #{_cartesian_forward.1} parent=0 // pred_check
    _
  $region15: #{_cartesian_forward.1} parent=0 // pred_check_branch
    %28 = sbr.rel (0) target = $region17
  $region16: #{_cartesian_forward.1} parent=0 // pred_region
    _
  $region17: #{_cartesian_forward.1} parent=0 // pred_fallthru
    _
  // Predicated region
  $region18: #{_cartesian_forward.1} parent=0 // pred_check
    _
  $region19: #{_cartesian_forward.1} parent=0 // pred_check_branch
    %30 = sbr.rel (0) target = $region21
  $region20: #{_cartesian_forward.1} parent=0 // pred_region
    _
  $region21: #{_cartesian_forward.1} parent=0 // pred_fallthru
    _
  // Predicated region
  $region22: #{_cartesian_forward.1} parent=0 // pred_check
    _
  $region23: #{_cartesian_forward.1} parent=0 // pred_check_branch
    %32 = sbr.rel (0) target = $region25
  $region24: #{_cartesian_forward.1} parent=0 // pred_region
    _
  $region25: #{_cartesian_forward.1} parent=0 // pred_fallthru
    _

</llo_original>
